<compile_context>
chip_gen: v7x
topology: tpu7x:2x2x1
jax: 0.10.0
libtpu: 0.0.40
codegen_flags: <defaults>
</compile_context>

<pallas_src>
import jax
import jax.numpy as jnp
from jax.experimental import pallas as pl
from jax.experimental.pallas import tpu as pltpu

LANE = 128
SUB = 16  # bf16 sublane packing: keep batch tiles a multiple of 16


def _round_up(n, m):
    return (n + m - 1) // m * m


def _mlp_kernel(x_ref, w1_ref, b1_ref, w2_ref, b2_ref,
                w3_ref, b3_ref, w4_ref, b4_ref, o_ref):
    # Fused 4-layer MLP on one (TB, D) f32 batch tile, everything in VMEM.
    # MXU: bf16 operands, f32 accumulate.  VPU: f32 bias-add + ReLU.
    h = x_ref[...].astype(jnp.bfloat16)                      # in-kernel cast (no wrapper pre-pass)
    h = jnp.dot(h, w1_ref[...], preferred_element_type=jnp.float32) + b1_ref[...]
    h = jnp.maximum(h, 0.0).astype(jnp.bfloat16)
    h = jnp.dot(h, w2_ref[...], preferred_element_type=jnp.float32) + b2_ref[...]
    h = jnp.maximum(h, 0.0).astype(jnp.bfloat16)
    h = jnp.dot(h, w3_ref[...], preferred_element_type=jnp.float32) + b3_ref[...]
    h = jnp.maximum(h, 0.0).astype(jnp.bfloat16)
    out = jnp.dot(h, w4_ref[...], preferred_element_type=jnp.float32) + b4_ref[...]
    o_ref[...] = out[:, :2]                                  # only the 2 real columns hit HBM


def regression_jkr_forward(x, params, *, max_batch_tile=4096):
    """x: (B, d0, d1) float32.  params: bf16 weights (in, out_padded) + f32 (1, out_padded) biases."""
    B = x.shape[0]
    x2d = x.reshape(B, -1)                     # Flatten only: no cast, no pad, no extra HBM pass
    D = x2d.shape[1]

    w1, b1 = params["w1"], params["b1"]
    w2, b2 = params["w2"], params["b2"]
    w3, b3 = params["w3"], params["b3"]
    w4, b4 = params["w4"], params["b4"]
    assert w1.shape[0] == D, "layer-1 weight rows must match the flattened input size"

    # Batch tile: multiple of 16 (bf16 packing); keep >= 2 grid steps for megacore sharding.
    TB = min(max_batch_tile, _round_up(B, SUB))
    if B > SUB and pl.cdiv(B, TB) < 2:
        TB = _round_up(pl.cdiv(B, 2), SUB)
    grid = (pl.cdiv(B, TB),)

    # VMEM budget for this tile size (double-buffered streams + resident weights + intermediates).
    weight_bytes = sum(int(p.size) * p.dtype.itemsize
                       for p in (w1, b1, w2, b2, w3, b3, w4, b4))
    stream_bytes = TB * (D * 4 + 2 * 4)                  # one f32 x tile + one (TB,2) f32 out tile
    interm_bytes = TB * (D * 2 + 6 * LANE * 4)           # bf16 x copy + f32/bf16 activations (generous)
    vmem_limit = 2 * stream_bytes + interm_bytes + 2 * weight_bytes + (2 << 20)
    vmem_limit = max(16 << 20, min(vmem_limit, 48 << 20))  # lift v5e default, stay under v7x 64 MiB

    flops = 2 * B * (D * LANE + 3 * LANE * LANE)
    bytes_accessed = B * D * 4 + B * 2 * 4 + weight_bytes

    const2d = lambda i: (0, 0)   # weights/biases: same block every step -> VMEM-resident

    out = pl.pallas_call(
        _mlp_kernel,
        out_shape=jax.ShapeDtypeStruct((B, 2), jnp.float32),
        grid=grid,
        in_specs=[
            pl.BlockSpec((TB, D), lambda i: (i, 0)),     # streamed f32 batch tile
            pl.BlockSpec(w1.shape, const2d),
            pl.BlockSpec(b1.shape, const2d),
            pl.BlockSpec(w2.shape, const2d),
            pl.BlockSpec(b2.shape, const2d),
            pl.BlockSpec(w3.shape, const2d),
            pl.BlockSpec(b3.shape, const2d),
            pl.BlockSpec(w4.shape, const2d),
            pl.BlockSpec(b4.shape, const2d),
        ],
        out_specs=pl.BlockSpec((TB, 2), lambda i: (i, 0)),   # last dim == full dim -> legal
        compiler_params=pltpu.CompilerParams(
            dimension_semantics=("parallel",),
            vmem_limit_bytes=int(vmem_limit)),
        cost_estimate=pl.CostEstimate(
            flops=int(flops), transcendentals=0,
            bytes_accessed=int(bytes_accessed)),
    )(x2d, w1, b1, w2, b2, w3, b3, w4, b4)

    return out   # already (B, 2); ragged-tile rows never reach HBM (masked OOB stores)


def init_params(key, input_shape, h1, h2):
    """PyTorch-style init U(-1/sqrt(fan_in), 1/sqrt(fan_in)), stored transposed to (in, out).
    Output dims are zero-padded to 128 lanes (exact: padded bias cols = 0, padded weight rows = 0);
    the layer-1 contraction dim stays at the real D (full-dim blocks are legal).  Weights are bf16."""
    d = input_shape[0] * input_shape[1]
    dims = [(d, h1), (h1, h2), (h2, 64), (64, 2)]
    params = {}
    in_pad = d
    for i, (fan_in, fan_out) in enumerate(dims, start=1):
        out_pad = _round_up(fan_out, LANE)
        key, kw, kb = jax.random.split(key, 3)
        bound = 1.0 / (fan_in ** 0.5)
        w = jax.random.uniform(kw, (fan_in, fan_out), jnp.float32, -bound, bound)
        b = jax.random.uniform(kb, (1, fan_out), jnp.float32, -bound, bound)
        wp = jnp.zeros((in_pad, out_pad), jnp.float32).at[:fan_in, :fan_out].set(w)
        bp = jnp.zeros((1, out_pad), jnp.float32).at[:, :fan_out].set(b)
        params[f"w{i}"] = wp.astype(jnp.bfloat16)    # MXU operand dtype
        params[f"b{i}"] = bp                         # f32 bias (VPU add)
        in_pad = out_pad
    return params


def _reference(x, params):
    """Pure-JAX reference with matching dtypes (bf16 matmuls, f32 accumulate)."""
    B = x.shape[0]
    h = x.reshape(B, -1).astype(jnp.bfloat16)
    for i in range(1, 5):
        h = jnp.dot(h, params[f"w{i}"], preferred_element_type=jnp.float32) + params[f"b{i}"]
        if i < 4:
            h = jnp.maximum(h, 0.0).astype(jnp.bfloat16)
    return h[:, :2]


if __name__ == "__main__":
    key = jax.random.PRNGKey(0)
    input_shape = (16, 16)      # input_size = 256
    H1, H2 = 64, 32
    batch = 50                  # non-multiple of the tile: exercises the ragged last grid step

    kx, kp = jax.random.split(key)
    x = jax.random.normal(kx, (batch,) + input_shape, jnp.float32)
    params = init_params(kp, input_shape, H1, H2)

    # Small batch tile in the test so the grid has several steps (incl. a ragged tail).
    out = regression_jkr_forward(x, params, max_batch_tile=16)
    out = jax.block_until_ready(out)
    assert out.shape == (batch, 2)

    ref = _reference(x, params)
    assert jnp.allclose(out, ref, atol=1e-2, rtol=1e-2), (
        float(jnp.max(jnp.abs(out - ref))))

    print("KERNEL_OK")
</pallas_src>

<mosaic_0001>
module attributes {stable_mosaic.version = 11 : i64} {
  func.func @_mlp_kernel(%arg0: i32, %arg1: memref<16x256xf32, #tpu.memory_space<vmem>>, %arg2: memref<256x128xbf16, #tpu.memory_space<vmem>>, %arg3: memref<1x128xf32, #tpu.memory_space<vmem>>, %arg4: memref<128x128xbf16, #tpu.memory_space<vmem>>, %arg5: memref<1x128xf32, #tpu.memory_space<vmem>>, %arg6: memref<128x128xbf16, #tpu.memory_space<vmem>>, %arg7: memref<1x128xf32, #tpu.memory_space<vmem>>, %arg8: memref<128x128xbf16, #tpu.memory_space<vmem>>, %arg9: memref<1x128xf32, #tpu.memory_space<vmem>>, %arg10: memref<16x2xf32, #tpu.memory_space<vmem>>) attributes {dimension_semantics = [#tpu.dimension_semantics<parallel>], iteration_bounds = array<i64: 4>, scalar_prefetch = 0 : i64, scratch_operands = 0 : i64, tpu.core_type = #tpu.core_type<tc>, window_params = [{transform_indices = @transform_0, window_bounds = array<i64: 16, 256>}, {pipeline_mode = #tpu.pipeline_mode<synchronous>, transform_indices = @transform_1, window_bounds = array<i64: 256, 128>}, {pipeline_mode = #tpu.pipeline_mode<synchronous>, transform_indices = @transform_2, window_bounds = array<i64: 1, 128>}, {pipeline_mode = #tpu.pipeline_mode<synchronous>, transform_indices = @transform_3, window_bounds = array<i64: 128, 128>}, {pipeline_mode = #tpu.pipeline_mode<synchronous>, transform_indices = @transform_4, window_bounds = array<i64: 1, 128>}, {pipeline_mode = #tpu.pipeline_mode<synchronous>, transform_indices = @transform_5, window_bounds = array<i64: 128, 128>}, {pipeline_mode = #tpu.pipeline_mode<synchronous>, transform_indices = @transform_6, window_bounds = array<i64: 1, 128>}, {pipeline_mode = #tpu.pipeline_mode<synchronous>, transform_indices = @transform_7, window_bounds = array<i64: 128, 128>}, {pipeline_mode = #tpu.pipeline_mode<synchronous>, transform_indices = @transform_8, window_bounds = array<i64: 1, 128>}, {transform_indices = @transform_9, window_bounds = array<i64: 16, 2>}]} {
    %c0 = arith.constant 0 : index
    %c0_0 = arith.constant 0 : index
    %0 = vector.load %arg1[%c0, %c0_0] : memref<16x256xf32, #tpu.memory_space<vmem>>, vector<16x256xf32>
    %1 = arith.truncf %0 : vector<16x256xf32> to vector<16x256xbf16>
    %c0_1 = arith.constant 0 : index
    %c0_2 = arith.constant 0 : index
    %2 = vector.load %arg2[%c0_1, %c0_2] : memref<256x128xbf16, #tpu.memory_space<vmem>>, vector<256x128xbf16>
    %cst = arith.constant dense<0.000000e+00> : vector<16x128xf32>
    %3 = tpu.matmul %1, %2, %cst {dimension_numbers = #tpu.dot_dimension_numbers<[1], [0], [0], [1], [0, 0, 1, 1], [], []>} : vector<16x256xbf16>, vector<256x128xbf16>, vector<16x128xf32> -> vector<16x128xf32>
    %c0_3 = arith.constant 0 : index
    %c0_4 = arith.constant 0 : index
    %4 = vector.load %arg3[%c0_3, %c0_4] : memref<1x128xf32, #tpu.memory_space<vmem>>, vector<1x128xf32>
    %5 = vector.broadcast %4 : vector<1x128xf32> to vector<16x128xf32>
    %6 = arith.addf %3, %5 : vector<16x128xf32>
    %cst_5 = arith.constant 0.000000e+00 : f32
    %7 = vector.broadcast %cst_5 : f32 to vector<16x128xf32>
    %8 = arith.maximumf %6, %7 : vector<16x128xf32>
    %9 = arith.truncf %8 : vector<16x128xf32> to vector<16x128xbf16>
    %c0_6 = arith.constant 0 : index
    %c0_7 = arith.constant 0 : index
    %10 = vector.load %arg4[%c0_6, %c0_7] : memref<128x128xbf16, #tpu.memory_space<vmem>>, vector<128x128xbf16>
    %cst_8 = arith.constant dense<0.000000e+00> : vector<16x128xf32>
    %11 = tpu.matmul %9, %10, %cst_8 {dimension_numbers = #tpu.dot_dimension_numbers<[1], [0], [0], [1], [0, 0, 1, 1], [], []>} : vector<16x128xbf16>, vector<128x128xbf16>, vector<16x128xf32> -> vector<16x128xf32>
    %c0_9 = arith.constant 0 : index
    %c0_10 = arith.constant 0 : index
    %12 = vector.load %arg5[%c0_9, %c0_10] : memref<1x128xf32, #tpu.memory_space<vmem>>, vector<1x128xf32>
    %13 = vector.broadcast %12 : vector<1x128xf32> to vector<16x128xf32>
    %14 = arith.addf %11, %13 : vector<16x128xf32>
    %cst_11 = arith.constant 0.000000e+00 : f32
    %15 = vector.broadcast %cst_11 : f32 to vector<16x128xf32>
    %16 = arith.maximumf %14, %15 : vector<16x128xf32>
    %17 = arith.truncf %16 : vector<16x128xf32> to vector<16x128xbf16>
    %c0_12 = arith.constant 0 : index
    %c0_13 = arith.constant 0 : index
    %18 = vector.load %arg6[%c0_12, %c0_13] : memref<128x128xbf16, #tpu.memory_space<vmem>>, vector<128x128xbf16>
    %cst_14 = arith.constant dense<0.000000e+00> : vector<16x128xf32>
    %19 = tpu.matmul %17, %18, %cst_14 {dimension_numbers = #tpu.dot_dimension_numbers<[1], [0], [0], [1], [0, 0, 1, 1], [], []>} : vector<16x128xbf16>, vector<128x128xbf16>, vector<16x128xf32> -> vector<16x128xf32>
    %c0_15 = arith.constant 0 : index
    %c0_16 = arith.constant 0 : index
    %20 = vector.load %arg7[%c0_15, %c0_16] : memref<1x128xf32, #tpu.memory_space<vmem>>, vector<1x128xf32>
    %21 = vector.broadcast %20 : vector<1x128xf32> to vector<16x128xf32>
    %22 = arith.addf %19, %21 : vector<16x128xf32>
    %cst_17 = arith.constant 0.000000e+00 : f32
    %23 = vector.broadcast %cst_17 : f32 to vector<16x128xf32>
    %24 = arith.maximumf %22, %23 : vector<16x128xf32>
    %25 = arith.truncf %24 : vector<16x128xf32> to vector<16x128xbf16>
    %c0_18 = arith.constant 0 : index
    %c0_19 = arith.constant 0 : index
    %26 = vector.load %arg8[%c0_18, %c0_19] : memref<128x128xbf16, #tpu.memory_space<vmem>>, vector<128x128xbf16>
    %cst_20 = arith.constant dense<0.000000e+00> : vector<16x128xf32>
    %27 = tpu.matmul %25, %26, %cst_20 {dimension_numbers = #tpu.dot_dimension_numbers<[1], [0], [0], [1], [0, 0, 1, 1], [], []>} : vector<16x128xbf16>, vector<128x128xbf16>, vector<16x128xf32> -> vector<16x128xf32>
    %c0_21 = arith.constant 0 : index
    %c0_22 = arith.constant 0 : index
    %28 = vector.load %arg9[%c0_21, %c0_22] : memref<1x128xf32, #tpu.memory_space<vmem>>, vector<1x128xf32>
    %29 = vector.broadcast %28 : vector<1x128xf32> to vector<16x128xf32>
    %30 = arith.addf %27, %29 : vector<16x128xf32>
    %31 = vector.extract_strided_slice %30 {offsets = [0, 0], sizes = [16, 2], strides = [1, 1]} : vector<16x128xf32> to vector<16x2xf32>
    %c0_23 = arith.constant 0 : index
    %c0_24 = arith.constant 0 : index
    %32 = vector.load %arg10[%c0_23, %c0_24] : memref<16x2xf32, #tpu.memory_space<vmem>>, vector<16x2xf32>
    tpu.vector_store %arg10[%c0_23, %c0_24], %31 {strides = array<i32>} : memref<16x2xf32, #tpu.memory_space<vmem>>, vector<16x2xf32>,
    return
  }
  func.func @transform_0(%arg0: i32) -> (i32, i32) {
    %c0_i32 = arith.constant 0 : i32
    %c0_i32_0 = arith.constant 0 : i32
    return %arg0, %c0_i32 : i32, i32
  }
  func.func @transform_1(%arg0: i32) -> (i32, i32) {
    %c0_i32 = arith.constant 0 : i32
    %c0_i32_0 = arith.constant 0 : i32
    %c0_i32_1 = arith.constant 0 : i32
    return %c0_i32, %c0_i32_0 : i32, i32
  }
  func.func @transform_2(%arg0: i32) -> (i32, i32) {
    %c0_i32 = arith.constant 0 : i32
    %c0_i32_0 = arith.constant 0 : i32
    %c0_i32_1 = arith.constant 0 : i32
    return %c0_i32, %c0_i32_0 : i32, i32
  }
  func.func @transform_3(%arg0: i32) -> (i32, i32) {
    %c0_i32 = arith.constant 0 : i32
    %c0_i32_0 = arith.constant 0 : i32
    %c0_i32_1 = arith.constant 0 : i32
    return %c0_i32, %c0_i32_0 : i32, i32
  }
  func.func @transform_4(%arg0: i32) -> (i32, i32) {
    %c0_i32 = arith.constant 0 : i32
    %c0_i32_0 = arith.constant 0 : i32
    %c0_i32_1 = arith.constant 0 : i32
    return %c0_i32, %c0_i32_0 : i32, i32
  }
  func.func @transform_5(%arg0: i32) -> (i32, i32) {
    %c0_i32 = arith.constant 0 : i32
    %c0_i32_0 = arith.constant 0 : i32
    %c0_i32_1 = arith.constant 0 : i32
    return %c0_i32, %c0_i32_0 : i32, i32
  }
  func.func @transform_6(%arg0: i32) -> (i32, i32) {
    %c0_i32 = arith.constant 0 : i32
    %c0_i32_0 = arith.constant 0 : i32
    %c0_i32_1 = arith.constant 0 : i32
    return %c0_i32, %c0_i32_0 : i32, i32
  }
  func.func @transform_7(%arg0: i32) -> (i32, i32) {
    %c0_i32 = arith.constant 0 : i32
    %c0_i32_0 = arith.constant 0 : i32
    %c0_i32_1 = arith.constant 0 : i32
    return %c0_i32, %c0_i32_0 : i32, i32
  }
  func.func @transform_8(%arg0: i32) -> (i32, i32) {
    %c0_i32 = arith.constant 0 : i32
    %c0_i32_0 = arith.constant 0 : i32
    %c0_i32_1 = arith.constant 0 : i32
    return %c0_i32, %c0_i32_0 : i32, i32
  }
  func.func @transform_9(%arg0: i32) -> (i32, i32) {
    %c0_i32 = arith.constant 0 : i32
    %c0_i32_0 = arith.constant 0 : i32
    return %arg0, %c0_i32 : i32, i32
  }
}

</mosaic_0001>

<llo_original>
// kernel: tpu_custom_call.1
$region0: #{tpu_custom_call.1}
  #allocation0 [shape = 'u32[]', space=smem, size = 0x4, offset = 0x4, fixed_abs, tag = 'smem constant byte address 0x4 - core index']
  #allocation1 [shape = 'u32[144,128]{1,0:T(1,128)}', space=vmem, size = 0x12000, scoped, tag = 'internal scratch']
  %s0 = inlined_call_operand.hbm [shape: f32[50,256], index: 0, kind: input, shape index: {}]
  %s1 = inlined_call_operand.hbm [shape: bf16[256,128], index: 1, kind: input, shape index: {}]
  %s2 = inlined_call_operand.vmem [shape: f32[1,128], index: 2, kind: input, shape index: {}]
  %s3 = inlined_call_operand.hbm [shape: bf16[128,128], index: 3, kind: input, shape index: {}]
  %s4 = inlined_call_operand.vmem [shape: f32[1,128], index: 4, kind: input, shape index: {}]
  %s5 = inlined_call_operand.hbm [shape: bf16[128,128], index: 5, kind: input, shape index: {}]
  %s6 = inlined_call_operand.vmem [shape: f32[1,128], index: 6, kind: input, shape index: {}]
  %s7 = inlined_call_operand.hbm [shape: bf16[128,128], index: 7, kind: input, shape index: {}]
  %s8 = inlined_call_operand.vmem [shape: f32[1,128], index: 8, kind: input, shape index: {}]
  %s9 = inlined_call_operand.vmem [shape: f32[50,2], index: 9, kind: output, shape index: {}]
  %s10 = sld [smem:[#allocation0]]
  $region137: #{tpu_custom_call.1} parent=0
    _
  %s12 = ssub.s32 1, %s10
  %s13 = scalar_select 0, %s12, %s10
  $region1: #{tpu_custom_call.1} parent=0
    #allocation2 [shape = 'u8[32768]{0}', space=vmem, size = 0x8000, scoped, tag = 'input window, operand 0']
    #allocation3 [shape = 's32[2]{0}', space=sflag, size = 0x8, scoped, tag = 'scoped memory for tpu_custom_call.1']
    #allocation4 [shape = 'u8[65536]{0}', space=vmem, size = 0x10000, scoped, tag = 'input window, operand 1, single buffered']
    #allocation5 [shape = 's32[1]{0}', space=sflag, size = 0x4, scoped, tag = 'scoped memory for tpu_custom_call.1']
    #allocation6 [shape = 'u8[32768]{0}', space=vmem, size = 0x8000, scoped, tag = 'input window, operand 3, single buffered']
    #allocation7 [shape = 'u8[32768]{0}', space=vmem, size = 0x8000, scoped, tag = 'input window, operand 5, single buffered']
    #allocation8 [shape = 's32[1]{0}', space=sflag, size = 0x4, scoped, tag = 'scoped memory for tpu_custom_call.1']
    #allocation9 [shape = 'u8[32768]{0}', space=vmem, size = 0x8000, scoped, tag = 'input window, operand 7, single buffered']
    #allocation10 [shape = 'u8[16384]{0}', space=vmem, size = 0x4000, scoped, tag = 'output window, operand 0']
    %14 = vsyncpa [#allocation3], 0
    %s15 = scalar_lea.sflag [#allocation3], 1
    %16 = vsyncpa %s15, 0
    %17 = vsyncpa [#allocation5], 0
    %18 = vsyncpa [#allocation8], 0
    loop: start=0, step=1, limit=6
    $region2: #{tpu_custom_call.1} parent=1 // loop_pre_header
      _
    $region3: #{tpu_custom_call.1} parent=1 // loop_header
      %s20 = sphi 0, %s24
      %p21 = scmp.ge.s32.totalorder %s20, 6
      %s30 = sphi 0, %s32
      %s33 = sphi 0, %s30
      %s34 = sphi 0, %s33
      %s50 = sphi 0, %s34
      %s54 = sphi 0, %s54
      %s56 = sphi 0, %s54
      %s57 = sphi 0, %s56
      %s71 = sphi 0, %s57
      %s75 = sphi 0, %s75
      %s77 = sphi 0, %s75
      %s78 = sphi 0, %s77
      %s92 = sphi 0, %s78
      %s96 = sphi 0, %s96
      %s98 = sphi 0, %s96
      %s99 = sphi 0, %s98
      %s113 = sphi 0, %s99
      %s117 = sphi 0, %s117
      %s119 = sphi 0, %s117
      %s120 = sphi 0, %s119
      %s134 = sphi 0, %s120
      %s138 = sphi 0, %s138
      %s140 = sphi 0, %s138
      %s141 = sphi 0, %s140
      %s155 = sphi 0, %s141
      %s159 = sphi 0, %s159
      %s161 = sphi 0, %s159
      %s162 = sphi 0, %s161
      %s176 = sphi 0, %s162
      %s180 = sphi 0, %s180
      %s182 = sphi 0, %s180
      %s183 = sphi 0, %s182
      %s197 = sphi 0, %s183
      %s201 = sphi 0, %s201
      %s203 = sphi 0, %s201
      %s204 = sphi 0, %s203
      %s218 = sphi 0, %s204
      %s224 = sphi 0, %s226
      %s227 = sphi 0, %s224
      %s228 = sphi 0, %s227
      %s244 = sphi 0, %s228
    $region4: #{tpu_custom_call.1} parent=1 // loop_header_branch
      %23 = sbr.rel (%p21) target = $region8
    $region5: #{tpu_custom_call.1} parent=1 // loop_body
      %s25 = ssub.s32 %s20, 1
      %s26 = ssub.s32 %s20, 2
      %s27 = sadd.s32 %s20, 1
      %s28 = ssub.s32 %s20, %s27
      %p29 = scmp.eq.s32.totalorder %s28, 0
      %s31 = sadd.s32 %s30, 1
      %s32 = scalar_select %p29, %s30, %s31
      %p35 = pneg %p29
      %p36 = scmp.eq.s32.totalorder %s20, 3
      %p37 = por %p35, %p36
      %p38 = scmp.ne.s32.totalorder %s30, %s33
      %p39 = scmp.eq.s32.totalorder %s20, 0
      %p40 = por %p38, %p39
      %p41 = scmp.ne.s32.totalorder %s30, %s33
      %p42 = scmp.eq.s32.totalorder %s25, 3
      %p43 = por %p41, %p42
      %p44 = scmp.ne.s32.totalorder %s33, %s34
      %p45 = scmp.eq.s32.totalorder %s25, 0
      %p46 = por %p44, %p45
      %p47 = scmp.ne.s32.totalorder %s33, %s34
      %p48 = scmp.eq.s32.totalorder %s26, 3
      %p49 = por %p47, %p48
      %p51 = scmp.ne.s32.totalorder %s34, %s50
      %p52 = scmp.eq.s32.totalorder %s26, 0
      %p53 = por %p51, %p52
      %s55 = sadd.s32 %s54, 1
      %p58 = scmp.eq.s32.totalorder %s20, 3
      %p59 = scmp.ne.s32.totalorder %s54, %s56
      %p60 = scmp.eq.s32.totalorder %s20, 0
      %p61 = por %p59, %p60
      %p62 = scmp.ne.s32.totalorder %s54, %s56
      %p63 = scmp.eq.s32.totalorder %s25, 3
      %p64 = por %p62, %p63
      %p65 = scmp.ne.s32.totalorder %s56, %s57
      %p66 = scmp.eq.s32.totalorder %s25, 0
      %p67 = por %p65, %p66
      %p68 = scmp.ne.s32.totalorder %s56, %s57
      %p69 = scmp.eq.s32.totalorder %s26, 3
      %p70 = por %p68, %p69
      %p72 = scmp.ne.s32.totalorder %s57, %s71
      %p73 = scmp.eq.s32.totalorder %s26, 0
      %p74 = por %p72, %p73
      %s76 = sadd.s32 %s75, 1
      %p79 = scmp.eq.s32.totalorder %s20, 3
      %p80 = scmp.ne.s32.totalorder %s75, %s77
      %p81 = scmp.eq.s32.totalorder %s20, 0
      %p82 = por %p80, %p81
      %p83 = scmp.ne.s32.totalorder %s75, %s77
      %p84 = scmp.eq.s32.totalorder %s25, 3
      %p85 = por %p83, %p84
      %p86 = scmp.ne.s32.totalorder %s77, %s78
      %p87 = scmp.eq.s32.totalorder %s25, 0
      %p88 = por %p86, %p87
      %p89 = scmp.ne.s32.totalorder %s77, %s78
      %p90 = scmp.eq.s32.totalorder %s26, 3
      %p91 = por %p89, %p90
      %p93 = scmp.ne.s32.totalorder %s78, %s92
      %p94 = scmp.eq.s32.totalorder %s26, 0
      %p95 = por %p93, %p94
      %s97 = sadd.s32 %s96, 1
      %p100 = scmp.eq.s32.totalorder %s20, 3
      %p101 = scmp.ne.s32.totalorder %s96, %s98
      %p102 = scmp.eq.s32.totalorder %s20, 0
      %p103 = por %p101, %p102
      %p104 = scmp.ne.s32.totalorder %s96, %s98
      %p105 = scmp.eq.s32.totalorder %s25, 3
      %p106 = por %p104, %p105
      %p107 = scmp.ne.s32.totalorder %s98, %s99
      %p108 = scmp.eq.s32.totalorder %s25, 0
      %p109 = por %p107, %p108
      %p110 = scmp.ne.s32.totalorder %s98, %s99
      %p111 = scmp.eq.s32.totalorder %s26, 3
      %p112 = por %p110, %p111
      %p114 = scmp.ne.s32.totalorder %s99, %s113
      %p115 = scmp.eq.s32.totalorder %s26, 0
      %p116 = por %p114, %p115
      %s118 = sadd.s32 %s117, 1
      %p121 = scmp.eq.s32.totalorder %s20, 3
      %p122 = scmp.ne.s32.totalorder %s117, %s119
      %p123 = scmp.eq.s32.totalorder %s20, 0
      %p124 = por %p122, %p123
      %p125 = scmp.ne.s32.totalorder %s117, %s119
      %p126 = scmp.eq.s32.totalorder %s25, 3
      %p127 = por %p125, %p126
      %p128 = scmp.ne.s32.totalorder %s119, %s120
      %p129 = scmp.eq.s32.totalorder %s25, 0
      %p130 = por %p128, %p129
      %p131 = scmp.ne.s32.totalorder %s119, %s120
      %p132 = scmp.eq.s32.totalorder %s26, 3
      %p133 = por %p131, %p132
      %p135 = scmp.ne.s32.totalorder %s120, %s134
      %p136 = scmp.eq.s32.totalorder %s26, 0
      %p137 = por %p135, %p136
      %s139 = sadd.s32 %s138, 1
      %p142 = scmp.eq.s32.totalorder %s20, 3
      %p143 = scmp.ne.s32.totalorder %s138, %s140
      %p144 = scmp.eq.s32.totalorder %s20, 0
      %p145 = por %p143, %p144
      %p146 = scmp.ne.s32.totalorder %s138, %s140
      %p147 = scmp.eq.s32.totalorder %s25, 3
      %p148 = por %p146, %p147
      %p149 = scmp.ne.s32.totalorder %s140, %s141
      %p150 = scmp.eq.s32.totalorder %s25, 0
      %p151 = por %p149, %p150
      %p152 = scmp.ne.s32.totalorder %s140, %s141
      %p153 = scmp.eq.s32.totalorder %s26, 3
      %p154 = por %p152, %p153
      %p156 = scmp.ne.s32.totalorder %s141, %s155
      %p157 = scmp.eq.s32.totalorder %s26, 0
      %p158 = por %p156, %p157
      %s160 = sadd.s32 %s159, 1
      %p163 = scmp.eq.s32.totalorder %s20, 3
      %p164 = scmp.ne.s32.totalorder %s159, %s161
      %p165 = scmp.eq.s32.totalorder %s20, 0
      %p166 = por %p164, %p165
      %p167 = scmp.ne.s32.totalorder %s159, %s161
      %p168 = scmp.eq.s32.totalorder %s25, 3
      %p169 = por %p167, %p168
      %p170 = scmp.ne.s32.totalorder %s161, %s162
      %p171 = scmp.eq.s32.totalorder %s25, 0
      %p172 = por %p170, %p171
      %p173 = scmp.ne.s32.totalorder %s161, %s162
      %p174 = scmp.eq.s32.totalorder %s26, 3
      %p175 = por %p173, %p174
      %p177 = scmp.ne.s32.totalorder %s162, %s176
      %p178 = scmp.eq.s32.totalorder %s26, 0
      %p179 = por %p177, %p178
      %s181 = sadd.s32 %s180, 1
      %p184 = scmp.eq.s32.totalorder %s20, 3
      %p185 = scmp.ne.s32.totalorder %s180, %s182
      %p186 = scmp.eq.s32.totalorder %s20, 0
      %p187 = por %p185, %p186
      %p188 = scmp.ne.s32.totalorder %s180, %s182
      %p189 = scmp.eq.s32.totalorder %s25, 3
      %p190 = por %p188, %p189
      %p191 = scmp.ne.s32.totalorder %s182, %s183
      %p192 = scmp.eq.s32.totalorder %s25, 0
      %p193 = por %p191, %p192
      %p194 = scmp.ne.s32.totalorder %s182, %s183
      %p195 = scmp.eq.s32.totalorder %s26, 3
      %p196 = por %p194, %p195
      %p198 = scmp.ne.s32.totalorder %s183, %s197
      %p199 = scmp.eq.s32.totalorder %s26, 0
      %p200 = por %p198, %p199
      %s202 = sadd.s32 %s201, 1
      %p205 = scmp.eq.s32.totalorder %s20, 3
      %p206 = scmp.ne.s32.totalorder %s201, %s203
      %p207 = scmp.eq.s32.totalorder %s20, 0
      %p208 = por %p206, %p207
      %p209 = scmp.ne.s32.totalorder %s201, %s203
      %p210 = scmp.eq.s32.totalorder %s25, 3
      %p211 = por %p209, %p210
      %p212 = scmp.ne.s32.totalorder %s203, %s204
      %p213 = scmp.eq.s32.totalorder %s25, 0
      %p214 = por %p212, %p213
      %p215 = scmp.ne.s32.totalorder %s203, %s204
      %p216 = scmp.eq.s32.totalorder %s26, 3
      %p217 = por %p215, %p216
      %p219 = scmp.ne.s32.totalorder %s204, %s218
      %p220 = scmp.eq.s32.totalorder %s26, 0
      %p221 = por %p219, %p220
      %s222 = ssub.s32 %s20, %s27
      %p223 = scmp.eq.s32.totalorder %s222, 0
      %s225 = sadd.s32 %s224, 1
      %s226 = scalar_select %p223, %s224, %s225
      %p229 = pneg %p223
      %p230 = scmp.eq.s32.totalorder %s20, 3
      %p231 = por %p229, %p230
      %p232 = scmp.ne.s32.totalorder %s224, %s227
      %p233 = scmp.eq.s32.totalorder %s20, 0
      %p234 = por %p232, %p233
      %p235 = scmp.ne.s32.totalorder %s224, %s227
      %p236 = scmp.eq.s32.totalorder %s25, 3
      %p237 = por %p235, %p236
      %p238 = scmp.ne.s32.totalorder %s227, %s228
      %p239 = scmp.eq.s32.totalorder %s25, 0
      %p240 = por %p238, %p239
      %p241 = scmp.ne.s32.totalorder %s227, %s228
      %p242 = scmp.eq.s32.totalorder %s26, 3
      %p243 = por %p241, %p242
      %p245 = scmp.ne.s32.totalorder %s228, %s244
      %p246 = scmp.eq.s32.totalorder %s26, 0
      %p247 = por %p245, %p246
      %p248 = scmp.le.s32.totalorder 1, %s20
      %p249 = scmp.lt.s32.totalorder %s20, 5
      %p250 = pnand %p248, %p249
      %p251 = pneg %p250
      // Predicated region
      $region9: #{tpu_custom_call.1} parent=5 // pred_check
        _
      $region10: #{tpu_custom_call.1} parent=5 // pred_check_branch
        %253 = sbr.rel (%p250) target = $region12
      $region11: #{tpu_custom_call.1} parent=5 // pred_region
        %s254 = ssub.s32 %s20, 1
        // Predicated region
        $region13: #{tpu_custom_call.1} parent=11 // pred_check
          %p255 = pneg %p67
        $region14: #{tpu_custom_call.1} parent=11 // pred_check_branch
          %257 = sbr.rel (%p255) target = $region16
        $region15: #{tpu_custom_call.1} parent=11 // pred_region
          %s259 = ssub.s32 2048, 2048
          %260 = vsyncadd [#allocation5], %s259
          %s261 = sshll.u32 [#allocation4], 4
          %s262 = int_to_ptr.vmem [resolvable:$true] %s261
          %267 = dma.hbm_to_vmem [thread:$0]  %s1, 2048, %s262, [#allocation5], 64, 64, 4
        $region16: #{tpu_custom_call.1} parent=11 // pred_fallthru
          _
        // Predicated region
        $region17: #{tpu_custom_call.1} parent=11 // pred_check
          %p268 = pneg %p88
        $region18: #{tpu_custom_call.1} parent=11 // pred_check_branch
          %270 = sbr.rel (%p268) target = $region20
        $region19: #{tpu_custom_call.1} parent=11 // pred_region
          _
        $region20: #{tpu_custom_call.1} parent=11 // pred_fallthru
          _
        // Predicated region
        $region21: #{tpu_custom_call.1} parent=11 // pred_check
          %p271 = pneg %p109
        $region22: #{tpu_custom_call.1} parent=11 // pred_check_branch
          %273 = sbr.rel (%p271) target = $region24
        $region23: #{tpu_custom_call.1} parent=11 // pred_region
          %s275 = ssub.s32 1024, 1024
          %276 = vsyncadd [#allocation5], %s275
          %s277 = sshll.u32 [#allocation6], 4
          %s278 = int_to_ptr.vmem [resolvable:$true] %s277
          %283 = dma.hbm_to_vmem [thread:$0]  %s3, 1024, %s278, [#allocation5], 64, 64, 4
        $region24: #{tpu_custom_call.1} parent=11 // pred_fallthru
          _
        // Predicated region
        $region25: #{tpu_custom_call.1} parent=11 // pred_check
          %p284 = pneg %p130
        $region26: #{tpu_custom_call.1} parent=11 // pred_check_branch
          %286 = sbr.rel (%p284) target = $region28
        $region27: #{tpu_custom_call.1} parent=11 // pred_region
          _
        $region28: #{tpu_custom_call.1} parent=11 // pred_fallthru
          _
        // Predicated region
        $region29: #{tpu_custom_call.1} parent=11 // pred_check
          %p287 = pneg %p151
        $region30: #{tpu_custom_call.1} parent=11 // pred_check_branch
          %289 = sbr.rel (%p287) target = $region32
        $region31: #{tpu_custom_call.1} parent=11 // pred_region
          %s291 = ssub.s32 1024, 1024
          %292 = vsyncadd [#allocation8], %s291
          %s293 = sshll.u32 [#allocation7], 4
          %s294 = int_to_ptr.vmem [resolvable:$true] %s293
          %299 = dma.hbm_to_vmem [thread:$0]  %s5, 1024, %s294, [#allocation8], 64, 64, 4
        $region32: #{tpu_custom_call.1} parent=11 // pred_fallthru
          _
        // Predicated region
        $region33: #{tpu_custom_call.1} parent=11 // pred_check
          %p300 = pneg %p172
        $region34: #{tpu_custom_call.1} parent=11 // pred_check_branch
          %302 = sbr.rel (%p300) target = $region36
        $region35: #{tpu_custom_call.1} parent=11 // pred_region
          _
        $region36: #{tpu_custom_call.1} parent=11 // pred_fallthru
          _
        // Predicated region
        $region37: #{tpu_custom_call.1} parent=11 // pred_check
          %p303 = pneg %p193
        $region38: #{tpu_custom_call.1} parent=11 // pred_check_branch
          %305 = sbr.rel (%p303) target = $region40
        $region39: #{tpu_custom_call.1} parent=11 // pred_region
          %s307 = ssub.s32 1024, 1024
          %308 = vsyncadd [#allocation8], %s307
          %s309 = sshll.u32 [#allocation9], 4
          %s310 = int_to_ptr.vmem [resolvable:$true] %s309
          %315 = dma.hbm_to_vmem [thread:$0]  %s7, 1024, %s310, [#allocation8], 64, 64, 4
        $region40: #{tpu_custom_call.1} parent=11 // pred_fallthru
          _
        // Predicated region
        $region41: #{tpu_custom_call.1} parent=11 // pred_check
          %p316 = pneg %p214
        $region42: #{tpu_custom_call.1} parent=11 // pred_check_branch
          %318 = sbr.rel (%p316) target = $region44
        $region43: #{tpu_custom_call.1} parent=11 // pred_region
          _
        $region44: #{tpu_custom_call.1} parent=11 // pred_fallthru
          _
      $region12: #{tpu_custom_call.1} parent=5 // pred_fallthru
        _
      %p319 = scmp.lt.s32.totalorder %s20, 4
      // Predicated region
      $region45: #{tpu_custom_call.1} parent=5 // pred_check
        %p320 = pneg %p319
      $region46: #{tpu_custom_call.1} parent=5 // pred_check_branch
        %322 = sbr.rel (%p320) target = $region48
      $region47: #{tpu_custom_call.1} parent=5 // pred_region
        // Predicated region
        $region49: #{tpu_custom_call.1} parent=47 // pred_check
          %p323 = pneg %p40
        $region50: #{tpu_custom_call.1} parent=47 // pred_check_branch
          %325 = sbr.rel (%p323) target = $region52
        $region51: #{tpu_custom_call.1} parent=47 // pred_region
          %s326 = sand.u32 %s30, 1
          %s327 = scalar_lea.sflag [#allocation3], %s326
          %s328 = sand.u32 %s30, 1
          %s329 = smul.addr %s328, 32
          %s330 = scalar_lea.vmem [#allocation2], %s329
          %s331 = smul.u32 2, %s20
          %s332 = ssub.s32 7, %s331
          %p333 = scmp.lt.s32.totalorder %s332, 2
          %s334 = scalar_select %p333, %s332, 2
          %s335 = smul.u32 128, %s334
          %s336 = smul.u32 %s335, 2
          %s338 = ssub.s32 512, %s336
          %339 = vsyncadd %s327, %s338
          %p340 = scmp.ne.s32.totalorder 0, %s336
          %s341 = smul.addr %s331, 2
          %s342 = smul.addr %s341, 128
          %s343 = scalar_lea.hbm %s0, %s342
          %s344 = smul.u32 16, %s334
          %s345 = sshll.u32 %s330, 4
          %s346 = int_to_ptr.vmem [resolvable:$true] %s345
          %s347 = sshll.u32 %s344, 4
          %351 = dma.hbm_to_vmem [thread:$0]  (%p340), %s343, %s347, %s346, %s327, 256, 256, 16
        $region52: #{tpu_custom_call.1} parent=47 // pred_fallthru
          _
      $region48: #{tpu_custom_call.1} parent=5 // pred_fallthru
        _
      %p352 = scmp.le.s32.totalorder 1, %s20
      %p353 = scmp.lt.s32.totalorder %s20, 5
      %p354 = pnand %p352, %p353
      %p355 = pneg %p354
      // Predicated region
      $region53: #{tpu_custom_call.1} parent=5 // pred_check
        _
      $region54: #{tpu_custom_call.1} parent=5 // pred_check_branch
        %357 = sbr.rel (%p354) target = $region56
      $region55: #{tpu_custom_call.1} parent=5 // pred_region
        %s358 = ssub.s32 %s20, 1
        %s359 = sand.u32 %s33, 1
        %s360 = scalar_lea.sflag [#allocation3], %s359
        %s361 = sand.u32 %s33, 1
        %s362 = smul.addr %s361, 32
        %s363 = scalar_lea.vmem [#allocation2], %s362
        // Predicated region
        $region57: #{tpu_custom_call.1} parent=55 // pred_check
          %p364 = pneg %p46
        $region58: #{tpu_custom_call.1} parent=55 // pred_check_branch
          %366 = sbr.rel (%p364) target = $region60
        $region59: #{tpu_custom_call.1} parent=55 // pred_region
          %367 = dma.done %s360, 512
        $region60: #{tpu_custom_call.1} parent=55 // pred_fallthru
          _
        // Predicated region
        $region61: #{tpu_custom_call.1} parent=55 // pred_check
          %p368 = pneg %p67
        $region62: #{tpu_custom_call.1} parent=55 // pred_check_branch
          %370 = sbr.rel (%p368) target = $region64
        $region63: #{tpu_custom_call.1} parent=55 // pred_region
          %371 = dma.done [#allocation5], 2048
        $region64: #{tpu_custom_call.1} parent=55 // pred_fallthru
          _
        // Predicated region
        $region65: #{tpu_custom_call.1} parent=55 // pred_check
          %p372 = pneg %p109
        $region66: #{tpu_custom_call.1} parent=55 // pred_check_branch
          %374 = sbr.rel (%p372) target = $region68
        $region67: #{tpu_custom_call.1} parent=55 // pred_region
          %375 = dma.done [#allocation5], 1024
        $region68: #{tpu_custom_call.1} parent=55 // pred_fallthru
          _
        // Predicated region
        $region69: #{tpu_custom_call.1} parent=55 // pred_check
          %p376 = pneg %p151
        $region70: #{tpu_custom_call.1} parent=55 // pred_check_branch
          %378 = sbr.rel (%p376) target = $region72
        $region71: #{tpu_custom_call.1} parent=55 // pred_region
          %379 = dma.done [#allocation8], 1024
        $region72: #{tpu_custom_call.1} parent=55 // pred_fallthru
          _
        // Predicated region
        $region73: #{tpu_custom_call.1} parent=55 // pred_check
          %p380 = pneg %p193
        $region74: #{tpu_custom_call.1} parent=55 // pred_check_branch
          %382 = sbr.rel (%p380) target = $region76
        $region75: #{tpu_custom_call.1} parent=55 // pred_region
          %383 = dma.done [#allocation8], 1024
        $region76: #{tpu_custom_call.1} parent=55 // pred_fallthru
          _
        %s384 = sand.u32 %s33, 1
        %s385 = scalar_lea.sflag [#allocation3], %s384
        %s386 = sand.u32 %s33, 1
        %s387 = smul.addr %s386, 32
        %s388 = scalar_lea.vmem [#allocation2], %s387
        %p389 = pneg %p46
        %p390 = pneg %p43
        %p391 = pneg %p67
        %p392 = pneg %p64
        %p393 = pneg %p88
        %p394 = pneg %p85
        %p395 = pneg %p109
        %p396 = pneg %p106
        %p397 = pneg %p130
        %p398 = pneg %p127
        %p399 = pneg %p151
        %p400 = pneg %p148
        %p401 = pneg %p172
        %p402 = pneg %p169
        %p403 = pneg %p193
        %p404 = pneg %p190
        %p405 = pneg %p214
        %p406 = pneg %p211
        %p407 = pneg %p240
        %p408 = pneg %p237
        %s409 = sand.u32 %s227, 1
        %s410 = sand.u32 %s227, 1
        %s411 = smul.addr %s410, 16
        %s412 = scalar_lea.vmem [#allocation10], %s411
        %s413 = smul.u32 2, %s25
        %s414 = ssub.s32 7, %s413
        %p415 = scmp.lt.s32.totalorder %s414, 2
        %s416 = scalar_select %p415, %s414, 2
        %s417 = smul.u32 128, %s416
        %s418 = smul.u32 %s417, 2
        %s419 = smul.u32 2, %s25
        %s420 = ssub.s32 7, %s419
        %p421 = scmp.lt.s32.totalorder %s420, 2
        %s422 = scalar_select %p421, %s420, 2
        %s423 = smul.u32 128, %s422
        %v425 = vld [vmem:[%s363] sm:$0xff]
        %v426 = vld [vmem:[%s363 + $0x8] sm:$0xff]
        %v427 = vld [vmem:[%s363 + $0x10] sm:$0xff]
        %v428 = vld [vmem:[%s363 + $0x18] sm:$0xff]
        %v429 = vpack.c.bf16 %v427, %v425
        %v430 = vpack.c.bf16 %v428, %v426
        %v431 = vld [vmem:[#allocation4] sm:$0xf]
        %v432 = vld [vmem:[#allocation4 + $0x4] sm:$0xf]
        %v433 = vld [vmem:[#allocation4 + $0x8] sm:$0xf]
        %v434 = vld [vmem:[#allocation4 + $0xc] sm:$0xf]
        %v435 = vld [vmem:[#allocation4 + $0x10] sm:$0xf]
        %v436 = vld [vmem:[#allocation4 + $0x14] sm:$0xf]
        %v437 = vld [vmem:[#allocation4 + $0x18] sm:$0xf]
        %v438 = vld [vmem:[#allocation4 + $0x1c] sm:$0xf]
        %v439 = vld [vmem:[#allocation4 + $0x20] sm:$0xf]
        %v440 = vld [vmem:[#allocation4 + $0x24] sm:$0xf]
        %v441 = vld [vmem:[#allocation4 + $0x28] sm:$0xf]
        %v442 = vld [vmem:[#allocation4 + $0x2c] sm:$0xf]
        %v443 = vld [vmem:[#allocation4 + $0x30] sm:$0xf]
        %v444 = vld [vmem:[#allocation4 + $0x34] sm:$0xf]
        %v445 = vld [vmem:[#allocation4 + $0x38] sm:$0xf]
        %v446 = vld [vmem:[#allocation4 + $0x3c] sm:$0xf]
        %v447 = vld [vmem:[#allocation4 + $0x40] sm:$0xf]
        %v448 = vld [vmem:[#allocation4 + $0x44] sm:$0xf]
        %v449 = vld [vmem:[#allocation4 + $0x48] sm:$0xf]
        %v450 = vld [vmem:[#allocation4 + $0x4c] sm:$0xf]
        %v451 = vld [vmem:[#allocation4 + $0x50] sm:$0xf]
        %v452 = vld [vmem:[#allocation4 + $0x54] sm:$0xf]
        %v453 = vld [vmem:[#allocation4 + $0x58] sm:$0xf]
        %v454 = vld [vmem:[#allocation4 + $0x5c] sm:$0xf]
        %v455 = vld [vmem:[#allocation4 + $0x60] sm:$0xf]
        %v456 = vld [vmem:[#allocation4 + $0x64] sm:$0xf]
        %v457 = vld [vmem:[#allocation4 + $0x68] sm:$0xf]
        %v458 = vld [vmem:[#allocation4 + $0x6c] sm:$0xf]
        %v459 = vld [vmem:[#allocation4 + $0x70] sm:$0xf]
        %v460 = vld [vmem:[#allocation4 + $0x74] sm:$0xf]
        %v461 = vld [vmem:[#allocation4 + $0x78] sm:$0xf]
        %v462 = vld [vmem:[#allocation4 + $0x7c] sm:$0xf]
        %v463 = vld [vmem:[%s2] sm:$0x1]
        %v465 = vlaneseq
        %v466 = vshrl.u32 %v465, 7
        %v467 = vsub.s32 0, %v466
        %v468 = vrot.slane %v463, %v467
        %v502 = vunpack.c.l.b16 %v431
        %v503 = vunpack.c.l.b16 %v432
        %v504 = vunpack.c.l.b16 %v433
        %v505 = vunpack.c.l.b16 %v434
        %v506 = vunpack.c.l.b16 %v435
        %v507 = vunpack.c.l.b16 %v436
        %v508 = vunpack.c.l.b16 %v437
        %v509 = vunpack.c.l.b16 %v438
        %v510 = vunpack.c.l.b16 %v439
        %v511 = vunpack.c.l.b16 %v440
        %v512 = vunpack.c.l.b16 %v441
        %v513 = vunpack.c.l.b16 %v442
        %v514 = vunpack.c.l.b16 %v443
        %v515 = vunpack.c.l.b16 %v444
        %v516 = vunpack.c.l.b16 %v445
        %v517 = vunpack.c.l.b16 %v446
        %v518 = vunpack.c.l.b16 %v447
        %v519 = vunpack.c.l.b16 %v448
        %v520 = vunpack.c.l.b16 %v449
        %v521 = vunpack.c.l.b16 %v450
        %v522 = vunpack.c.l.b16 %v451
        %v523 = vunpack.c.l.b16 %v452
        %v524 = vunpack.c.l.b16 %v453
        %v525 = vunpack.c.l.b16 %v454
        %v526 = vunpack.c.l.b16 %v455
        %v527 = vunpack.c.l.b16 %v456
        %v528 = vunpack.c.l.b16 %v457
        %v529 = vunpack.c.l.b16 %v458
        %v530 = vunpack.c.l.b16 %v459
        %v531 = vunpack.c.l.b16 %v460
        %v532 = vunpack.c.l.b16 %v461
        %v533 = vunpack.c.l.b16 %v462
        %v534 = vpack.c.b16 %v503, %v502
        %v535 = vpack.c.b16 %v505, %v504
        %v536 = vpack.c.b16 %v507, %v506
        %v537 = vpack.c.b16 %v509, %v508
        %v538 = vpack.c.b16 %v511, %v510
        %v539 = vpack.c.b16 %v513, %v512
        %v540 = vpack.c.b16 %v515, %v514
        %v541 = vpack.c.b16 %v517, %v516
        %v542 = vpack.c.b16 %v519, %v518
        %v543 = vpack.c.b16 %v521, %v520
        %v544 = vpack.c.b16 %v523, %v522
        %v545 = vpack.c.b16 %v525, %v524
        %v546 = vpack.c.b16 %v527, %v526
        %v547 = vpack.c.b16 %v529, %v528
        %v548 = vpack.c.b16 %v531, %v530
        %v549 = vpack.c.b16 %v533, %v532
        %566 = vmatprep.subr.bf16.mxu0 0
        %567 = vmatpush1.bf16.msra.mxu0 %v534
        %568 = vmatprep.subr.bf16.mxu0 0
        %569 = vmatpush1.bf16.msra.mxu0 %v535
        %570 = vmatprep.subr.bf16.mxu0 0
        %571 = vmatpush1.bf16.msra.mxu0 %v536
        %572 = vmatprep.subr.bf16.mxu0 0
        %573 = vmatpush1.bf16.msra.mxu0 %v537
        %574 = vmatprep.subr.bf16.mxu0 0
        %575 = vmatpush1.bf16.msra.mxu0 %v538
        %576 = vmatprep.subr.bf16.mxu0 0
        %577 = vmatpush1.bf16.msra.mxu0 %v539
        %578 = vmatprep.subr.bf16.mxu0 0
        %579 = vmatpush1.bf16.msra.mxu0 %v540
        %580 = vmatprep.subr.bf16.mxu0 0
        %581 = vmatpush1.bf16.msra.mxu0 %v541
        %582 = vmatprep.subr.bf16.mxu0 0
        %583 = vmatpush1.bf16.msra.mxu0 %v542
        %584 = vmatprep.subr.bf16.mxu0 0
        %585 = vmatpush1.bf16.msra.mxu0 %v543
        %586 = vmatprep.subr.bf16.mxu0 0
        %587 = vmatpush1.bf16.msra.mxu0 %v544
        %588 = vmatprep.subr.bf16.mxu0 0
        %589 = vmatpush1.bf16.msra.mxu0 %v545
        %590 = vmatprep.subr.bf16.mxu0 0
        %591 = vmatpush1.bf16.msra.mxu0 %v546
        %592 = vmatprep.subr.bf16.mxu0 0
        %593 = vmatpush1.bf16.msra.mxu0 %v547
        %594 = vmatprep.subr.bf16.mxu0 0
        %595 = vmatpush1.bf16.msra.mxu0 %v548
        %596 = vmatprep.subr.bf16.mxu0 0
        %597 = vmatpush1.bf16.msra.mxu0 %v549
        %598 = vmatprep.mubr.bf16.mxu0 %v430
        %599 = vmatmul.mubr.bf16.gmra.mrb[0].mxu0 %v429
        %v600 = vpop.f32.mrb[0].mxu0
        %v601 = vadd.f32 %v468, %v600
        %v602 = vpop.f32.mrb[0].mxu0
        %v603 = vpop.f32.mrb[0].mxu0
        %v604 = vadd.f32 %v468, %v603
        %v605 = vpop.f32.mrb[0].mxu0
        %606 = vdwg.mxu0
        %v607 = vmax.f32 %v601, 0.0
        %v608 = vmax.f32 %v604, 0.0
        %v609 = vpack.c.bf16 %v608, %v607
        %v610 = vld [vmem:[#allocation6] sm:$0xf]
        %v611 = vld [vmem:[#allocation6 + $0x4] sm:$0xf]
        %v612 = vld [vmem:[#allocation6 + $0x8] sm:$0xf]
        %v613 = vld [vmem:[#allocation6 + $0xc] sm:$0xf]
        %v614 = vld [vmem:[#allocation6 + $0x10] sm:$0xf]
        %v615 = vld [vmem:[#allocation6 + $0x14] sm:$0xf]
        %v616 = vld [vmem:[#allocation6 + $0x18] sm:$0xf]
        %v617 = vld [vmem:[#allocation6 + $0x1c] sm:$0xf]
        %v618 = vld [vmem:[#allocation6 + $0x20] sm:$0xf]
        %v619 = vld [vmem:[#allocation6 + $0x24] sm:$0xf]
        %v620 = vld [vmem:[#allocation6 + $0x28] sm:$0xf]
        %v621 = vld [vmem:[#allocation6 + $0x2c] sm:$0xf]
        %v622 = vld [vmem:[#allocation6 + $0x30] sm:$0xf]
        %v623 = vld [vmem:[#allocation6 + $0x34] sm:$0xf]
        %v624 = vld [vmem:[#allocation6 + $0x38] sm:$0xf]
        %v625 = vld [vmem:[#allocation6 + $0x3c] sm:$0xf]
        %v626 = vld [vmem:[%s4] sm:$0x1]
        %v628 = vlaneseq
        %v629 = vshrl.u32 %v628, 7
        %v630 = vsub.s32 0, %v629
        %v631 = vrot.slane %v626, %v630
        %v649 = vunpack.c.l.b16 %v610
        %v650 = vunpack.c.l.b16 %v611
        %v651 = vunpack.c.l.b16 %v612
        %v652 = vunpack.c.l.b16 %v613
        %v653 = vunpack.c.l.b16 %v614
        %v654 = vunpack.c.l.b16 %v615
        %v655 = vunpack.c.l.b16 %v616
        %v656 = vunpack.c.l.b16 %v617
        %v657 = vunpack.c.l.b16 %v618
        %v658 = vunpack.c.l.b16 %v619
        %v659 = vunpack.c.l.b16 %v620
        %v660 = vunpack.c.l.b16 %v621
        %v661 = vunpack.c.l.b16 %v622
        %v662 = vunpack.c.l.b16 %v623
        %v663 = vunpack.c.l.b16 %v624
        %v664 = vunpack.c.l.b16 %v625
        %v665 = vpack.c.b16 %v650, %v649
        %v666 = vpack.c.b16 %v652, %v651
        %v667 = vpack.c.b16 %v654, %v653
        %v668 = vpack.c.b16 %v656, %v655
        %v669 = vpack.c.b16 %v658, %v657
        %v670 = vpack.c.b16 %v660, %v659
        %v671 = vpack.c.b16 %v662, %v661
        %v672 = vpack.c.b16 %v664, %v663
        %681 = vmatprep.subr.bf16.mxu0 0
        %682 = vmatpush1.bf16.msra.mxu0 %v665
        %683 = vmatprep.subr.bf16.mxu0 0
        %684 = vmatpush1.bf16.msra.mxu0 %v666
        %685 = vmatprep.subr.bf16.mxu0 0
        %686 = vmatpush1.bf16.msra.mxu0 %v667
        %687 = vmatprep.subr.bf16.mxu0 0
        %688 = vmatpush1.bf16.msra.mxu0 %v668
        %689 = vmatprep.subr.bf16.mxu0 0
        %690 = vmatpush1.bf16.msra.mxu0 %v669
        %691 = vmatprep.subr.bf16.mxu0 0
        %692 = vmatpush1.bf16.msra.mxu0 %v670
        %693 = vmatprep.subr.bf16.mxu0 0
        %694 = vmatpush1.bf16.msra.mxu0 %v671
        %695 = vmatprep.subr.bf16.mxu0 0
        %696 = vmatpush1.bf16.msra.mxu0 %v672
        %697 = vmatprep.subr.bf16.mxu0 0
        %698 = vmatpush1.bf16.msra.mxu0 0
        %699 = vmatprep.subr.bf16.mxu0 0
        %700 = vmatpush1.bf16.msra.mxu0 0
        %701 = vmatprep.subr.bf16.mxu0 0
        %702 = vmatpush1.bf16.msra.mxu0 0
        %703 = vmatprep.subr.bf16.mxu0 0
        %704 = vmatpush1.bf16.msra.mxu0 0
        %705 = vmatprep.subr.bf16.mxu0 0
        %706 = vmatpush1.bf16.msra.mxu0 0
        %707 = vmatprep.subr.bf16.mxu0 0
        %708 = vmatpush1.bf16.msra.mxu0 0
        %709 = vmatprep.subr.bf16.mxu0 0
        %710 = vmatpush1.bf16.msra.mxu0 0
        %711 = vmatprep.subr.bf16.mxu0 0
        %712 = vmatpush1.bf16.msra.mxu0 0
        %713 = vmatprep.mubr.bf16.mxu0 0
        %714 = vmatmul.mubr.bf16.gmra.mrb[0].mxu0 %v609
        %v715 = vpop.f32.mrb[0].mxu0
        %v716 = vadd.f32 %v631, %v715
        %v717 = vpop.f32.mrb[0].mxu0
        %v718 = vpop.f32.mrb[0].mxu0
        %v719 = vadd.f32 %v631, %v718
        %v720 = vpop.f32.mrb[0].mxu0
        %721 = vdwg.mxu0
        %v722 = vmax.f32 %v716, 0.0
        %v723 = vmax.f32 %v719, 0.0
        %v724 = vpack.c.bf16 %v723, %v722
        %v725 = vld [vmem:[#allocation7] sm:$0xf]
        %v726 = vld [vmem:[#allocation7 + $0x4] sm:$0xf]
        %v727 = vld [vmem:[#allocation7 + $0x8] sm:$0xf]
        %v728 = vld [vmem:[#allocation7 + $0xc] sm:$0xf]
        %v729 = vld [vmem:[#allocation7 + $0x10] sm:$0xf]
        %v730 = vld [vmem:[#allocation7 + $0x14] sm:$0xf]
        %v731 = vld [vmem:[#allocation7 + $0x18] sm:$0xf]
        %v732 = vld [vmem:[#allocation7 + $0x1c] sm:$0xf]
        %v733 = vld [vmem:[#allocation7 + $0x20] sm:$0xf]
        %v734 = vld [vmem:[#allocation7 + $0x24] sm:$0xf]
        %v735 = vld [vmem:[#allocation7 + $0x28] sm:$0xf]
        %v736 = vld [vmem:[#allocation7 + $0x2c] sm:$0xf]
        %v737 = vld [vmem:[#allocation7 + $0x30] sm:$0xf]
        %v738 = vld [vmem:[#allocation7 + $0x34] sm:$0xf]
        %v739 = vld [vmem:[#allocation7 + $0x38] sm:$0xf]
        %v740 = vld [vmem:[#allocation7 + $0x3c] sm:$0xf]
        %v741 = vld [vmem:[%s6] sm:$0x1]
        %v743 = vlaneseq
        %v744 = vshrl.u32 %v743, 7
        %v745 = vsub.s32 0, %v744
        %v746 = vrot.slane %v741, %v745
        %v764 = vunpack.c.l.b16 %v725
        %v765 = vunpack.c.l.b16 %v726
        %v766 = vunpack.c.l.b16 %v727
        %v767 = vunpack.c.l.b16 %v728
        %v768 = vunpack.c.l.b16 %v729
        %v769 = vunpack.c.l.b16 %v730
        %v770 = vunpack.c.l.b16 %v731
        %v771 = vunpack.c.l.b16 %v732
        %v772 = vunpack.c.l.b16 %v733
        %v773 = vunpack.c.l.b16 %v734
        %v774 = vunpack.c.l.b16 %v735
        %v775 = vunpack.c.l.b16 %v736
        %v776 = vunpack.c.l.b16 %v737
        %v777 = vunpack.c.l.b16 %v738
        %v778 = vunpack.c.l.b16 %v739
        %v779 = vunpack.c.l.b16 %v740
        %v780 = vpack.c.b16 %v765, %v764
        %v781 = vpack.c.b16 %v767, %v766
        %v782 = vpack.c.b16 %v769, %v768
        %v783 = vpack.c.b16 %v771, %v770
        %v784 = vpack.c.b16 %v773, %v772
        %v785 = vpack.c.b16 %v775, %v774
        %v786 = vpack.c.b16 %v777, %v776
        %v787 = vpack.c.b16 %v779, %v778
        %796 = vmatprep.subr.bf16.mxu0 0
        %797 = vmatpush1.bf16.msra.mxu0 %v780
        %798 = vmatprep.subr.bf16.mxu0 0
        %799 = vmatpush1.bf16.msra.mxu0 %v781
        %800 = vmatprep.subr.bf16.mxu0 0
        %801 = vmatpush1.bf16.msra.mxu0 %v782
        %802 = vmatprep.subr.bf16.mxu0 0
        %803 = vmatpush1.bf16.msra.mxu0 %v783
        %804 = vmatprep.subr.bf16.mxu0 0
        %805 = vmatpush1.bf16.msra.mxu0 %v784
        %806 = vmatprep.subr.bf16.mxu0 0
        %807 = vmatpush1.bf16.msra.mxu0 %v785
        %808 = vmatprep.subr.bf16.mxu0 0
        %809 = vmatpush1.bf16.msra.mxu0 %v786
        %810 = vmatprep.subr.bf16.mxu0 0
        %811 = vmatpush1.bf16.msra.mxu0 %v787
        %812 = vmatprep.subr.bf16.mxu0 0
        %813 = vmatpush1.bf16.msra.mxu0 0
        %814 = vmatprep.subr.bf16.mxu0 0
        %815 = vmatpush1.bf16.msra.mxu0 0
        %816 = vmatprep.subr.bf16.mxu0 0
        %817 = vmatpush1.bf16.msra.mxu0 0
        %818 = vmatprep.subr.bf16.mxu0 0
        %819 = vmatpush1.bf16.msra.mxu0 0
        %820 = vmatprep.subr.bf16.mxu0 0
        %821 = vmatpush1.bf16.msra.mxu0 0
        %822 = vmatprep.subr.bf16.mxu0 0
        %823 = vmatpush1.bf16.msra.mxu0 0
        %824 = vmatprep.subr.bf16.mxu0 0
        %825 = vmatpush1.bf16.msra.mxu0 0
        %826 = vmatprep.subr.bf16.mxu0 0
        %827 = vmatpush1.bf16.msra.mxu0 0
        %828 = vmatprep.mubr.bf16.mxu0 0
        %829 = vmatmul.mubr.bf16.gmra.mrb[0].mxu0 %v724
        %v830 = vpop.f32.mrb[0].mxu0
        %v831 = vadd.f32 %v746, %v830
        %v832 = vpop.f32.mrb[0].mxu0
        %v833 = vpop.f32.mrb[0].mxu0
        %v834 = vadd.f32 %v746, %v833
        %v835 = vpop.f32.mrb[0].mxu0
        %836 = vdwg.mxu0
        %v837 = vmax.f32 %v831, 0.0
        %v838 = vmax.f32 %v834, 0.0
        %v839 = vpack.c.bf16 %v838, %v837
        %v840 = vld [vmem:[#allocation9] sm:$0xf]
        %v841 = vld [vmem:[#allocation9 + $0x4] sm:$0xf]
        %v842 = vld [vmem:[#allocation9 + $0x8] sm:$0xf]
        %v843 = vld [vmem:[#allocation9 + $0xc] sm:$0xf]
        %v844 = vld [vmem:[#allocation9 + $0x10] sm:$0xf]
        %v845 = vld [vmem:[#allocation9 + $0x14] sm:$0xf]
        %v846 = vld [vmem:[#allocation9 + $0x18] sm:$0xf]
        %v847 = vld [vmem:[#allocation9 + $0x1c] sm:$0xf]
        %v848 = vld [vmem:[#allocation9 + $0x20] sm:$0xf]
        %v849 = vld [vmem:[#allocation9 + $0x24] sm:$0xf]
        %v850 = vld [vmem:[#allocation9 + $0x28] sm:$0xf]
        %v851 = vld [vmem:[#allocation9 + $0x2c] sm:$0xf]
        %v852 = vld [vmem:[#allocation9 + $0x30] sm:$0xf]
        %v853 = vld [vmem:[#allocation9 + $0x34] sm:$0xf]
        %v854 = vld [vmem:[#allocation9 + $0x38] sm:$0xf]
        %v855 = vld [vmem:[#allocation9 + $0x3c] sm:$0xf]
        %v856 = vld [vmem:[%s8] sm:$0x1]
        %v858 = vlaneseq
        %v859 = vshrl.u32 %v858, 7
        %v860 = vsub.s32 0, %v859
        %v861 = vrot.slane %v856, %v860
        %v879 = vunpack.c.l.b16 %v840
        %v880 = vunpack.c.l.b16 %v841
        %v881 = vunpack.c.l.b16 %v842
        %v882 = vunpack.c.l.b16 %v843
        %v883 = vunpack.c.l.b16 %v844
        %v884 = vunpack.c.l.b16 %v845
        %v885 = vunpack.c.l.b16 %v846
        %v886 = vunpack.c.l.b16 %v847
        %v887 = vunpack.c.l.b16 %v848
        %v888 = vunpack.c.l.b16 %v849
        %v889 = vunpack.c.l.b16 %v850
        %v890 = vunpack.c.l.b16 %v851
        %v891 = vunpack.c.l.b16 %v852
        %v892 = vunpack.c.l.b16 %v853
        %v893 = vunpack.c.l.b16 %v854
        %v894 = vunpack.c.l.b16 %v855
        %v895 = vpack.c.b16 %v880, %v879
        %v896 = vpack.c.b16 %v882, %v881
        %v897 = vpack.c.b16 %v884, %v883
        %v898 = vpack.c.b16 %v886, %v885
        %v899 = vpack.c.b16 %v888, %v887
        %v900 = vpack.c.b16 %v890, %v889
        %v901 = vpack.c.b16 %v892, %v891
        %v902 = vpack.c.b16 %v894, %v893
        %911 = vmatprep.subr.bf16.mxu0 0
        %912 = vmatpush1.bf16.msra.mxu0 %v895
        %913 = vmatprep.subr.bf16.mxu0 0
        %914 = vmatpush1.bf16.msra.mxu0 %v896
        %915 = vmatprep.subr.bf16.mxu0 0
        %916 = vmatpush1.bf16.msra.mxu0 %v897
        %917 = vmatprep.subr.bf16.mxu0 0
        %918 = vmatpush1.bf16.msra.mxu0 %v898
        %919 = vmatprep.subr.bf16.mxu0 0
        %920 = vmatpush1.bf16.msra.mxu0 %v899
        %921 = vmatprep.subr.bf16.mxu0 0
        %922 = vmatpush1.bf16.msra.mxu0 %v900
        %923 = vmatprep.subr.bf16.mxu0 0
        %924 = vmatpush1.bf16.msra.mxu0 %v901
        %925 = vmatprep.subr.bf16.mxu0 0
        %926 = vmatpush1.bf16.msra.mxu0 %v902
        %927 = vmatprep.subr.bf16.mxu0 0
        %928 = vmatpush1.bf16.msra.mxu0 0
        %929 = vmatprep.subr.bf16.mxu0 0
        %930 = vmatpush1.bf16.msra.mxu0 0
        %931 = vmatprep.subr.bf16.mxu0 0
        %932 = vmatpush1.bf16.msra.mxu0 0
        %933 = vmatprep.subr.bf16.mxu0 0
        %934 = vmatpush1.bf16.msra.mxu0 0
        %935 = vmatprep.subr.bf16.mxu0 0
        %936 = vmatpush1.bf16.msra.mxu0 0
        %937 = vmatprep.subr.bf16.mxu0 0
        %938 = vmatpush1.bf16.msra.mxu0 0
        %939 = vmatprep.subr.bf16.mxu0 0
        %940 = vmatpush1.bf16.msra.mxu0 0
        %941 = vmatprep.subr.bf16.mxu0 0
        %942 = vmatpush1.bf16.msra.mxu0 0
        %943 = vmatprep.mubr.bf16.mxu0 0
        %944 = vmatmul.mubr.bf16.gmra.mrb[0].mxu0 %v839
        %v945 = vpop.f32.mrb[0].mxu0
        %v946 = vadd.f32 %v861, %v945
        %v947 = vpop.f32.mrb[0].mxu0
        %v948 = vpop.f32.mrb[0].mxu0
        %v949 = vadd.f32 %v861, %v948
        %v950 = vpop.f32.mrb[0].mxu0
        %951 = vdwg.mxu0
        %vm952 = vcmask 15360
        %953 = vst.msk [vmem:[%s412] sm:$0xff] %vm952, %v946
        %954 = vst.msk [vmem:[%s412 + $0x8] sm:$0xff] %vm952, %v949
        %s955 = sand.u32 %s227, 1
        %s956 = sand.u32 %s227, 1
        %s957 = smul.addr %s956, 16
        %s958 = scalar_lea.vmem [#allocation10], %s957
        // Predicated region
        $region77: #{tpu_custom_call.1} parent=55 // pred_check
          %p959 = pneg %p237
        $region78: #{tpu_custom_call.1} parent=55 // pred_check_branch
          %961 = sbr.rel (%p959) target = $region80
        $region79: #{tpu_custom_call.1} parent=55 // pred_region
          %s962 = smul.u32 2, %s25
          %s963 = ssub.s32 7, %s962
          %p964 = scmp.lt.s32.totalorder %s963, 2
          %s965 = scalar_select %p964, %s963, 2
          %s966 = smul.u32 128, %s965
          %p967 = scmp.ne.s32.totalorder 0, %s966
          %s968 = smul.addr %s962, 8
          %s969 = scalar_lea.vmem %s9, %s968
          // Predicated region
          $region81: #{tpu_custom_call.1} parent=79 // pred_check
            %p970 = pneg %p967
          $region82: #{tpu_custom_call.1} parent=79 // pred_check_branch
            %972 = sbr.rel (%p970) target = $region84
          $region83: #{tpu_custom_call.1} parent=79 // pred_region
            // Predicated region
            $region85: #{tpu_custom_call.1} parent=83 // pred_check
              _
            $region86: #{tpu_custom_call.1} parent=83 // pred_check_branch
              %974 = sbr.rel (0) target = $region88
            $region87: #{tpu_custom_call.1} parent=83 // pred_region
              // Predicated region
              $region107: #{tpu_custom_call.1} parent=87 // pred_check
                _
              $region108: #{tpu_custom_call.1} parent=87 // pred_check_branch
                %1025 = sbr.rel (0) target = $region110
              $region109: #{tpu_custom_call.1} parent=87 // pred_region
                %s1026 = sshrl.u32 %s965, 1
                // While loop
                $region111: #{tpu_custom_call.1} parent=109 // loop_pre_header
                  _
                $region112: #{tpu_custom_call.1} parent=109 // loop_header
                  %s1028 = sphi 0, %s1030
                  %p1029 = scmp.ge.s32.totalorder %s1028, %s1026
                  %s1033 = sphi 0, %s1042
                  %s1034 = sphi %s958, %s1045
                  %s1035 = sphi %s969, %s1046
                $region113: #{tpu_custom_call.1} parent=109 // loop_header_branch
                  %1032 = sbr.rel (%p1029) target = $region117
                $region114: #{tpu_custom_call.1} parent=109 // loop_body
                  %v1036 = vld [vmem:[%s1034] sm:$0xff]
                  %1037 = vst [vmem:[%s1035] sm:$0xff] %v1036
                  %v1038 = vld [vmem:[%s1034 + $0x8] sm:$0xff]
                  %1039 = vst [vmem:[%s1035 + $0x8] sm:$0xff] %v1038
                  %s1040 = sadd.s32 1, %s1033
                  %p1041 = scmp.ge.s32.totalorder %s1040, %s1026
                  %s1042 = scalar_select %p1041, 0, %s1040
                  %s1043 = smul.u32 %s1042, 16
                  %s1044 = smul.u32 %s1042, 16
                  %s1045 = scalar_lea.vmem %s958, %s1043 [#allocation10]
                  %s1046 = scalar_lea.vmem %s969, %s1044
                $region115: #{tpu_custom_call.1} parent=109 // loop_footer
                  %s1030 = sadd.s32 %s1028, 1
                $region116: #{tpu_custom_call.1} parent=109 // loop_footer_branch
                  %1027 = sbr.rel target = $region112
                $region117: #{tpu_custom_call.1} parent=109 // loop_exit
                  _
                %s1047 = sshrl.u32 %s965, 1
                %s1048 = sand.u32 %s965, 1
                %s1049 = smul.u32 %s1047, 2
                %s1050 = smul.u32 8, %s1049
                %s1051 = scalar_lea.vmem %s958, %s1050 [#allocation10]
                %s1052 = smul.u32 8, %s1049
                %s1053 = scalar_lea.vmem %s969, %s1052
                // While loop
                $region118: #{tpu_custom_call.1} parent=109 // loop_pre_header
                  _
                $region119: #{tpu_custom_call.1} parent=109 // loop_header
                  %s1055 = sphi 0, %s1057
                  %p1056 = scmp.ge.s32.totalorder %s1055, %s1048
                  %s1060 = sphi 0, %s1067
                  %s1061 = sphi %s1051, %s1070
                  %s1062 = sphi %s1053, %s1071
                $region120: #{tpu_custom_call.1} parent=109 // loop_header_branch
                  %1059 = sbr.rel (%p1056) target = $region124
                $region121: #{tpu_custom_call.1} parent=109 // loop_body
                  %v1063 = vld [vmem:[%s1061] sm:$0xff]
                  %1064 = vst [vmem:[%s1062] sm:$0xff] %v1063
                  %s1065 = sadd.s32 1, %s1060
                  %p1066 = scmp.ge.s32.totalorder %s1065, %s1048
                  %s1067 = scalar_select %p1066, 0, %s1065
                  %s1068 = smul.u32 %s1067, 8
                  %s1069 = smul.u32 %s1067, 8
                  %s1070 = scalar_lea.vmem %s1051, %s1068 [#allocation10]
                  %s1071 = scalar_lea.vmem %s1053, %s1069
                $region122: #{tpu_custom_call.1} parent=109 // loop_footer
                  %s1057 = sadd.s32 %s1055, 1
                $region123: #{tpu_custom_call.1} parent=109 // loop_footer_branch
                  %1054 = sbr.rel target = $region119
                $region124: #{tpu_custom_call.1} parent=109 // loop_exit
                  _
              $region110: #{tpu_custom_call.1} parent=87 // pred_fallthru
                _
              // Predicated region
              $region125: #{tpu_custom_call.1} parent=87 // pred_check
                _
              $region126: #{tpu_custom_call.1} parent=87 // pred_check_branch
                %1073 = sbr.rel target = $region128
              $region127: #{tpu_custom_call.1} parent=87 // pred_region
                _
              $region128: #{tpu_custom_call.1} parent=87 // pred_fallthru
                _
            $region88: #{tpu_custom_call.1} parent=83 // pred_fallthru
              _
            // Predicated region
            $region89: #{tpu_custom_call.1} parent=83 // pred_check
              _
            $region90: #{tpu_custom_call.1} parent=83 // pred_check_branch
              %976 = sbr.rel target = $region92
            $region91: #{tpu_custom_call.1} parent=83 // pred_region
              %s978 = sshrl.u32 %s965, 1
              // While loop
              $region93: #{tpu_custom_call.1} parent=91 // loop_pre_header
                _
              $region94: #{tpu_custom_call.1} parent=91 // loop_header
                %s980 = sphi 0, %s982
                %p981 = scmp.ge.s32.totalorder %s980, %s978
                %s985 = sphi 0, %s994
                %s986 = sphi %s958, %s997
                %s987 = sphi %s969, %s998
              $region95: #{tpu_custom_call.1} parent=91 // loop_header_branch
                %984 = sbr.rel (%p981) target = $region99
              $region96: #{tpu_custom_call.1} parent=91 // loop_body
                %v988 = vld [vmem:[%s986] sm:$0xff]
                %989 = vst [vmem:[%s987] sm:$0xff] %v988
                %v990 = vld [vmem:[%s986 + $0x8] sm:$0xff]
                %991 = vst [vmem:[%s987 + $0x8] sm:$0xff] %v990
                %s992 = sadd.s32 1, %s985
                %p993 = scmp.ge.s32.totalorder %s992, %s978
                %s994 = scalar_select %p993, 0, %s992
                %s995 = smul.u32 %s994, 16
                %s996 = smul.u32 %s994, 16
                %s997 = scalar_lea.vmem %s958, %s995 [#allocation10]
                %s998 = scalar_lea.vmem %s969, %s996
              $region97: #{tpu_custom_call.1} parent=91 // loop_footer
                %s982 = sadd.s32 %s980, 1
              $region98: #{tpu_custom_call.1} parent=91 // loop_footer_branch
                %979 = sbr.rel target = $region94
              $region99: #{tpu_custom_call.1} parent=91 // loop_exit
                _
              %s999 = sshrl.u32 %s965, 1
              %s1000 = sand.u32 %s965, 1
              %s1001 = smul.u32 %s999, 2
              %s1002 = smul.u32 8, %s1001
              %s1003 = scalar_lea.vmem %s958, %s1002 [#allocation10]
              %s1004 = smul.u32 8, %s1001
              %s1005 = scalar_lea.vmem %s969, %s1004
              // While loop
              $region100: #{tpu_custom_call.1} parent=91 // loop_pre_header
                _
              $region101: #{tpu_custom_call.1} parent=91 // loop_header
                %s1007 = sphi 0, %s1009
                %p1008 = scmp.ge.s32.totalorder %s1007, %s1000
                %s1012 = sphi 0, %s1019
                %s1013 = sphi %s1003, %s1022
                %s1014 = sphi %s1005, %s1023
              $region102: #{tpu_custom_call.1} parent=91 // loop_header_branch
                %1011 = sbr.rel (%p1008) target = $region106
              $region103: #{tpu_custom_call.1} parent=91 // loop_body
                %v1015 = vld [vmem:[%s1013] sm:$0xff]
                %1016 = vst [vmem:[%s1014] sm:$0xff] %v1015
                %s1017 = sadd.s32 1, %s1012
                %p1018 = scmp.ge.s32.totalorder %s1017, %s1000
                %s1019 = scalar_select %p1018, 0, %s1017
                %s1020 = smul.u32 %s1019, 8
                %s1021 = smul.u32 %s1019, 8
                %s1022 = scalar_lea.vmem %s1003, %s1020 [#allocation10]
                %s1023 = scalar_lea.vmem %s1005, %s1021
              $region104: #{tpu_custom_call.1} parent=91 // loop_footer
                %s1009 = sadd.s32 %s1007, 1
              $region105: #{tpu_custom_call.1} parent=91 // loop_footer_branch
                %1006 = sbr.rel target = $region101
              $region106: #{tpu_custom_call.1} parent=91 // loop_exit
                _
            $region92: #{tpu_custom_call.1} parent=83 // pred_fallthru
              _
          $region84: #{tpu_custom_call.1} parent=79 // pred_fallthru
            _
          %1074 = vnop
        $region80: #{tpu_custom_call.1} parent=55 // pred_fallthru
          _
      $region56: #{tpu_custom_call.1} parent=5 // pred_fallthru
        _
      %p1075 = scmp.le.s32.totalorder 2, %s20
      // Predicated region
      $region129: #{tpu_custom_call.1} parent=5 // pred_check
        %p1076 = pneg %p1075
      $region130: #{tpu_custom_call.1} parent=5 // pred_check_branch
        %1078 = sbr.rel (%p1076) target = $region132
      $region131: #{tpu_custom_call.1} parent=5 // pred_region
        %s1079 = ssub.s32 %s20, 2
        // Predicated region
        $region133: #{tpu_custom_call.1} parent=131 // pred_check
          %p1080 = pneg %p243
        $region134: #{tpu_custom_call.1} parent=131 // pred_check_branch
          %1082 = sbr.rel (%p1080) target = $region136
        $region135: #{tpu_custom_call.1} parent=131 // pred_region
          %s1083 = sand.u32 %s228, 1
          %s1084 = sand.u32 %s228, 1
          %s1085 = smul.addr %s1084, 16
          %s1086 = scalar_lea.vmem [#allocation10], %s1085
        $region136: #{tpu_custom_call.1} parent=131 // pred_fallthru
          _
      $region132: #{tpu_custom_call.1} parent=5 // pred_fallthru
        _
    $region6: #{tpu_custom_call.1} parent=1 // loop_footer
      %s24 = sadd.s32 1, %s20
    $region7: #{tpu_custom_call.1} parent=1 // loop_footer_branch
      %19 = sbr.rel target = $region3
    $region8: #{tpu_custom_call.1} parent=1 // loop_exit
      _
    %1087 = vsyncpa [#allocation3], 1
    %s1088 = scalar_lea.sflag [#allocation3], 1
    %1089 = vsyncpa %s1088, 1
    %1090 = vsyncpa [#allocation5], 1
    %1091 = vsyncpa [#allocation8], 1

</llo_original>
